<compile_context>
chip_gen: v5e
topology: v5e:2x2
jax: 0.10.0
libtpu: 0.0.40
codegen_flags: <defaults>
</compile_context>

<pallas_src>
import jax
import jax.numpy as jnp
from jax.experimental import pallas as pl
from jax.experimental.pallas import tpu as pltpu


def _add_exp_kernel(x_ref, o_ref):
    # x_ref: (1, 1) float32 in SMEM; o_ref: (1, 1) result in VMEM.
    x = x_ref[0, 0]                                        # scalar load from SMEM
    xv = jnp.full(o_ref.shape, x, dtype=jnp.float32)       # single (1,1) value in a vreg
    o_ref[...] = (xv + jnp.exp(xv)).astype(o_ref.dtype)    # EUP exp + VPU add, tiny store


def _pallas_add_exp_scalar(x_scalar_2d, out_dtype):
    """x_scalar_2d: (1, 1) float32 -> (1, 1) out_dtype value of x + exp(x)."""
    return pl.pallas_call(
        _add_exp_kernel,
        out_shape=jax.ShapeDtypeStruct((1, 1), out_dtype),
        in_specs=[pl.BlockSpec(memory_space=pltpu.MemorySpace.SMEM)],
        out_specs=pl.BlockSpec(memory_space=pltpu.MemorySpace.VMEM),
    )(x_scalar_2d)


def model_forward(x1):
    """Equivalent of Model.forward: x1 + math.exp(x1).

    x1 must be a single-element array (matching PyTorch's math.exp(tensor)
    requirement).  Returns an array with the same shape as x1 and a floating
    dtype (PyTorch promotion: tensor + python float -> floating tensor).
    """
    x1 = jnp.asarray(x1)
    assert x1.size == 1, "math.exp(tensor) requires a single-element tensor"
    orig_shape = x1.shape
    # PyTorch promotion: int + python-float -> float; float dtypes keep dtype.
    out_dtype = jnp.result_type(x1.dtype, jnp.float32)

    x_smem = x1.astype(jnp.float32).reshape(1, 1)
    out = _pallas_add_exp_scalar(x_smem, out_dtype)

    return out.reshape(orig_shape)


if __name__ == "__main__":
    key = jax.random.PRNGKey(0)
    # Single-element input, consistent with math.exp(tensor) semantics.
    x1 = jax.random.normal(key, (1,), dtype=jnp.float32)

    y = model_forward(x1)
    jax.block_until_ready(y)

    # Reference check (plain JAX).
    y_ref = x1 + jnp.exp(x1)
    assert y.shape == x1.shape and y.dtype == y_ref.dtype
    assert jnp.allclose(y, y_ref, rtol=1e-6, atol=1e-6), (y, y_ref)

    print("KERNEL_OK")
</pallas_src>

<mosaic_0001>
module attributes {stable_mosaic.version = 11 : i64} {
  func.func @_add_exp_kernel(%arg0: memref<1x1xf32, #tpu.memory_space<smem>>, %arg1: memref<1x1xf32, #tpu.memory_space<vmem>>) attributes {dimension_semantics = [], scalar_prefetch = 0 : i64, scratch_operands = 0 : i64, tpu.core_type = #tpu.core_type<tc>} {
    %c0 = arith.constant 0 : index
    %c0_0 = arith.constant 0 : index
    %0 = memref.load %arg0[%c0, %c0_0] : memref<1x1xf32, #tpu.memory_space<smem>>
    %1 = vector.broadcast %0 : f32 to vector<1x1xf32>
    %2 = math.exp %1 : vector<1x1xf32>
    %3 = arith.addf %1, %2 : vector<1x1xf32>
    %c0_1 = arith.constant 0 : index
    %c0_2 = arith.constant 0 : index
    %4 = vector.load %arg1[%c0_1, %c0_2] : memref<1x1xf32, #tpu.memory_space<vmem>>, vector<1x1xf32>
    tpu.vector_store %arg1[%c0_1, %c0_2], %3 {strides = array<i32>} : memref<1x1xf32, #tpu.memory_space<vmem>>, vector<1x1xf32>,
    return
  }
}

</mosaic_0001>

<llo_original>
// kernel: tpu_custom_call.1
$region0: #{tpu_custom_call.1}
  #allocation0 [shape = 'u32[]', space=smem, size = 0x4, offset = 0x4, fixed_abs, tag = 'smem constant byte address 0x4 - core index']
  #allocation1 [shape = 'u32[72,128]{1,0:T(1,128)}', space=vmem, size = 0x9000, scoped, tag = 'internal scratch']
  #allocation2 [shape = 'f32[1,1]{1,0:T(1,128)S(6)}', space=smem, size = 0x200, scoped, tag = 'scoped memory for tpu_custom_call.1']
  %s0 = inlined_call_operand.<no memory space> [shape: f32[1,1], index: 0, kind: input, shape index: {}]
  %s1 = inlined_call_operand.hbm [shape: f32[1,1], index: 1, kind: output, shape index: {}]
  %s2 = sld [smem:[#allocation0]]
  $region14: #{tpu_custom_call.1} parent=0
    _
  %s4 = ssub.s32 1, %s2
  %s5 = scalar_select 0, %s4, %s2
  %6 = sst [smem:[#allocation2]] %s0
  $region1: #{tpu_custom_call.1} parent=0
    #allocation3 [shape = 'u8[512]{0}', space=vmem, size = 0x400, scoped, tag = 'output window, operand 0, single buffered']
    #allocation4 [shape = 's32[1]{0}', space=sflag, size = 0x4, scoped, tag = 'scoped memory for tpu_custom_call.1']
    %7 = vsyncpa [#allocation4], 0
    // Predicated region
    $region2: #{tpu_custom_call.1} parent=1 // pred_check
      _
    $region3: #{tpu_custom_call.1} parent=1 // pred_check_branch
      %9 = sbr.rel (0) target = $region5
    $region4: #{tpu_custom_call.1} parent=1 // pred_region
      _
    $region5: #{tpu_custom_call.1} parent=1 // pred_fallthru
      _
    %s10 = sld [smem:[#allocation2]]
    %v11 = vstv %s10
    %v12 = vmul.f32 %v11, 1.442695
    %v13 = vpow.pop %v12
    %v14 = vadd.f32 %v11, %v13
    %vm15 = vcmask 0
    %16 = vst.msk [vmem:[#allocation3] sm:$0x1] %vm15, %v14
    // Predicated region
    $region6: #{tpu_custom_call.1} parent=1 // pred_check
      _
    $region7: #{tpu_custom_call.1} parent=1 // pred_check_branch
      %18 = sbr.rel (0) target = $region9
    $region8: #{tpu_custom_call.1} parent=1 // pred_region
      %20 = vsyncadd [#allocation4], 0
      %s22 = sshll.u32 [#allocation3], 4
      %s23 = int_to_ptr.vmem [resolvable:$true] %s22
      %s24 = sshll.u32 %s1, 4
      %s25 = int_to_ptr.hbm [resolvable:$true] %s24
      %27 = dma.vmem_to_hbm [thread:$0]  %s23, 16, %s25, [#allocation4]
    $region9: #{tpu_custom_call.1} parent=1 // pred_fallthru
      _
    // Predicated region
    $region10: #{tpu_custom_call.1} parent=1 // pred_check
      _
    $region11: #{tpu_custom_call.1} parent=1 // pred_check_branch
      %29 = sbr.rel (0) target = $region13
    $region12: #{tpu_custom_call.1} parent=1 // pred_region
      %31 = dma.done [#allocation4], 16
    $region13: #{tpu_custom_call.1} parent=1 // pred_fallthru
      _
    %32 = vsyncpa [#allocation4], 1

</llo_original>
